<compile_context>
chip_gen: v7x
topology: tpu7x:2x2x1
jax: 0.10.0
libtpu: 0.0.40
codegen_flags: <defaults>
</compile_context>

<pallas_src>
import math

import jax
import jax.numpy as jnp
from jax.experimental import pallas as pl
from jax.experimental.pallas import tpu as pltpu


# ---------------------------------------------------------------------------
# Kernel
# ---------------------------------------------------------------------------
def _make_odefunc_kernel(NB, H, Hp, W, Cin, Chid, Cout, two_convs):
    """Fused (conv3x3 'same' + LeakyReLU(0.2)) x {1,2} for NB batch images.

    Refs (two_convs=True):
      x_ref : (NB, H, W*Cin)        input slab (stored dtype)
      w1_ref: (3, W*Cin, W*Chid)    banded conv1 weights (compute dtype)
      b1_ref: (1, W*Chid)           conv1 bias, f32
      w2_ref: (3, W*Chid, W*Cout)   banded conv2 weights (compute dtype)
      b2_ref: (1, W*Cout)           conv2 bias, f32
      o_ref : (NB, H, W*Cout)       output slab, f32
      xp1   : (NB*Hp, W*Cin)        padded conv1 plane (VMEM, compute dtype)
      xp2   : (NB*Hp, W*Chid)       padded conv2 plane (VMEM, compute dtype)

    Image n occupies padded-plane rows [n*Hp+1, n*Hp+1+H); rows n*Hp and
    n*Hp+H+1 are its zero halos.  Valid output rows of the stacked matmul sit
    at [n*Hp, n*Hp+H); rows in the inter-image gap are garbage, never stored.
    """
    M = (NB - 1) * Hp + H
    alpha = 0.2

    def conv_stage(xp_ref, w_ref, b_ref):
        # 3 row-shifted lane-dense matmuls (not 9 taps), f32 accumulation.
        acc = jnp.dot(xp_ref[0:M, :], w_ref[0], preferred_element_type=jnp.float32)
        acc = acc + jnp.dot(xp_ref[1:M + 1, :], w_ref[1],
                            preferred_element_type=jnp.float32)
        acc = acc + jnp.dot(xp_ref[2:M + 2, :], w_ref[2],
                            preferred_element_type=jnp.float32)
        acc = acc + b_ref[0]                       # f32 bias
        return jnp.maximum(acc, alpha * acc)       # LeakyReLU(0.2), f32

    def fill(xp_ref, get_rows):
        # Zero only the 2 halo rows per image that valid outputs read, then
        # write the interior (lane offset 0: padding is absorbed in weights).
        zero = jnp.zeros((1, xp_ref.shape[1]), xp_ref.dtype)
        for n in range(NB):
            base = n * Hp
            xp_ref[base:base + 1, :] = zero                    # top halo
            xp_ref[base + H + 1:base + H + 2, :] = zero        # bottom halo
            xp_ref[base + 1:base + 1 + H, :] = get_rows(n)     # interior

    if two_convs:
        def kernel(x_ref, w1_ref, b1_ref, w2_ref, b2_ref, o_ref, xp1_ref, xp2_ref):
            fill(xp1_ref, lambda n: x_ref[n].astype(xp1_ref.dtype))
            act1 = conv_stage(xp1_ref, w1_ref, b1_ref)          # (M, W*Chid) f32
            # hidden activation never leaves VMEM
            fill(xp2_ref, lambda n: act1[n * Hp:n * Hp + H, :].astype(xp2_ref.dtype))
            act2 = conv_stage(xp2_ref, w2_ref, b2_ref)          # (M, W*Cout) f32
            for n in range(NB):
                o_ref[n] = act2[n * Hp:n * Hp + H, :].astype(o_ref.dtype)
    else:
        def kernel(x_ref, w1_ref, b1_ref, o_ref, xp1_ref):
            fill(xp1_ref, lambda n: x_ref[n].astype(xp1_ref.dtype))
            act1 = conv_stage(xp1_ref, w1_ref, b1_ref)
            for n in range(NB):
                o_ref[n] = act1[n * Hp:n * Hp + H, :].astype(o_ref.dtype)

    return kernel


# ---------------------------------------------------------------------------
# Host-side (one-time) weight transform
# ---------------------------------------------------------------------------
def _build_banded_weights(w, W):
    """(3, 3, Cin, Cout) conv weight -> (3, W*Cin, W*Cout) banded matrices.

    Left/right 'same' padding is absorbed by clipping out-of-range taps:
      B[dy][j*Cin + ci, x*Cout + co] = w[dy, dx, ci, co]  where j = x + dx - 1
    (terms with j outside [0, W) are dropped — the padded input there is 0).
    Then  out_rows[h] = sum_dy xpad_rows[h + dy] @ B[dy]  with xpad_rows the
    (H+2, W*Cin) vertically zero-padded, channel-flattened input plane.
    """
    kh, kw, Cin, Cout = w.shape
    pad = kw // 2
    j = jnp.arange(W)
    xw = jnp.arange(W)
    dx = jnp.arange(kw)
    ind = (j[None, :, None] == xw[None, None, :] + dx[:, None, None] - pad)
    B = jnp.einsum("xjw,yxio->yjiwo", ind.astype(w.dtype), w)
    return B.reshape(kh, W * Cin, W * Cout)


def prepare_odefunc_params(params, W, compute_dtype=jnp.float32):
    """One-time host-side transform of ODEFunc params for spatial width W.

    Weight dtype casts are done HERE (once), not per ODE RHS evaluation.
    Biases stay f32 (f32 epilogue).  Use compute_dtype=jnp.bfloat16 on
    v6e/v7x for bf16 MXU inputs with f32 accumulation and f32 output.
    """
    prepared = {
        "w1": _build_banded_weights(params["w1"], W).astype(compute_dtype),
        "b1": jnp.tile(params["b1"], W).reshape(1, -1).astype(jnp.float32),
    }
    if "w2" in params:
        prepared["w2"] = _build_banded_weights(params["w2"], W).astype(compute_dtype)
        prepared["b2"] = jnp.tile(params["b2"], W).reshape(1, -1).astype(jnp.float32)
    return prepared


# ---------------------------------------------------------------------------
# Forward wrappers
# ---------------------------------------------------------------------------
def odefunc_forward_nhwc(t, x_nhwc, prepared, batch_block=None):
    """ODEFunc.forward with NHWC state. x_nhwc: (N,H,W,Cin) -> (N,H,W,Cout) f32."""
    del t  # unused, matching the PyTorch forward
    N, H, W, Cin = x_nhwc.shape
    two_convs = "w2" in prepared
    Chid = prepared["w1"].shape[-1] // W
    Cout = prepared["w2"].shape[-1] // W if two_convs else Chid
    assert prepared["w1"].shape[1] == W * Cin, "prepared params do not match (W, Cin)"
    compute_dtype = prepared["w1"].dtype

    # Batch-block size: stack NB images along the MXU M axis so each matmul
    # sees ~>=128 rows.  NB must divide N (keeps block semantics simple).
    if batch_block is None:
        NB = min(N, max(1, -(-128 // max(H, 1))))
        while N % NB:
            NB -= 1
    else:
        NB = batch_block
        assert N % NB == 0, "batch_block must divide the batch size"
    Hp = ((H + 2 + 7) // 8) * 8           # per-image row stride (sublane aligned)

    # NHWC -> (N, H, W*Cin): metadata-only reshape; lane axis is W*Cin.
    # No astype here: the cast to compute_dtype is fused with the in-kernel
    # scratch write (no extra HBM pass per RHS evaluation).
    x2 = x_nhwc.reshape(N, H, W * Cin)

    in_specs = [
        pl.BlockSpec((NB, H, W * Cin), lambda b: (b, 0, 0)),
        pl.BlockSpec((3, W * Cin, W * Chid), lambda b: (0, 0, 0)),
        pl.BlockSpec((1, W * Chid), lambda b: (0, 0)),
    ]
    args = [x2, prepared["w1"], prepared["b1"]]
    scratch_shapes = [pltpu.VMEM((NB * Hp, W * Cin), compute_dtype)]
    if two_convs:
        in_specs += [
            pl.BlockSpec((3, W * Chid, W * Cout), lambda b: (0, 0, 0)),
            pl.BlockSpec((1, W * Cout), lambda b: (0, 0)),
        ]
        args += [prepared["w2"], prepared["b2"]]
        scratch_shapes += [pltpu.VMEM((NB * Hp, W * Chid), compute_dtype)]

    kernel = _make_odefunc_kernel(NB, H, Hp, W, Cin, Chid, Cout, two_convs)

    # Explicit VMEM budget from the real buffer sizes (never below the 32 MiB
    # default so small configs keep compiling as before).
    csz = jnp.dtype(compute_dtype).itemsize
    vmem = 2 * NB * H * W * Cin * x2.dtype.itemsize          # x block (dbl-buffered)
    vmem += 2 * NB * H * W * Cout * 4                        # out block (f32)
    vmem += 2 * 3 * W * Cin * W * Chid * csz + 2 * W * Chid * 4
    vmem += NB * Hp * W * Cin * csz
    if two_convs:
        vmem += 2 * 3 * W * Chid * W * Cout * csz + 2 * W * Cout * 4
        vmem += NB * Hp * W * Chid * csz
    vmem_limit = int(min(128 << 20, max(32 << 20, 2 * vmem)))

    out = pl.pallas_call(
        kernel,
        # Output is always f32 so an ODE solver never accumulates in bf16.
        out_shape=jax.ShapeDtypeStruct((N, H, W * Cout), jnp.float32),
        grid_spec=pltpu.PrefetchScalarGridSpec(
            num_scalar_prefetch=0,
            grid=(N // NB,),
            in_specs=in_specs,
            out_specs=pl.BlockSpec((NB, H, W * Cout), lambda b: (b, 0, 0)),
            scratch_shapes=scratch_shapes,
        ),
        compiler_params=pltpu.CompilerParams(
            dimension_semantics=("parallel",),
            vmem_limit_bytes=vmem_limit),
    )(*args)
    return out.reshape(N, H, W, Cout)


def odefunc_forward(t, x_nchw, prepared, batch_block=None):
    """Drop-in equivalent of ODEFunc.forward(t, x) with NCHW in/out.

    For ODE integration, prefer odefunc_forward_nhwc and keep the solver state
    NHWC so these transposes are paid only at the solver boundary.
    """
    # TODO(synk): x.requires_grad_() is a PyTorch autograd tag with no
    # forward-pass equivalent; use jax.grad / jax.vjp around this function.
    x = jnp.transpose(x_nchw, (0, 2, 3, 1))
    y = odefunc_forward_nhwc(t, x, prepared, batch_block=batch_block)
    return jnp.transpose(y, (0, 3, 1, 2))


# ---------------------------------------------------------------------------
# Parameter init (matches the PyTorch module)
# ---------------------------------------------------------------------------
def xavier_uniform_conv(key, kh, kw, cin, cout, gain):
    """nn.init.xavier_uniform_ on a Conv2d weight, stored as (kh, kw, cin, cout)."""
    fan_in = cin * kh * kw
    fan_out = cout * kh * kw
    bound = gain * math.sqrt(6.0 / (fan_in + fan_out))
    return jax.random.uniform(key, (kh, kw, cin, cout), jnp.float32,
                              minval=-bound, maxval=bound)


def default_conv_bias(key, kh, kw, cin, cout):
    """PyTorch Conv2d default bias init: U(-1/sqrt(fan_in), 1/sqrt(fan_in))."""
    fan_in = cin * kh * kw
    bound = 1.0 / math.sqrt(fan_in)
    return jax.random.uniform(key, (cout,), jnp.float32,
                              minval=-bound, maxval=bound)


def init_odefunc_params(key, dim, dim_hidden=None):
    dim_hidden = dim_hidden if dim_hidden else dim
    k1, k2, k3, k4 = jax.random.split(key, 4)
    params = {
        "w1": xavier_uniform_conv(k1, 3, 3, dim, dim_hidden, math.sqrt(2)),
        "b1": default_conv_bias(k2, 3, 3, dim, dim_hidden),
    }
    if dim_hidden != dim:
        params["w2"] = xavier_uniform_conv(k3, 3, 3, dim_hidden, dim, math.sqrt(2))
        params["b2"] = default_conv_bias(k4, 3, 3, dim_hidden, dim)
    return params


# ---------------------------------------------------------------------------
# Pure-JAX reference (lax conv) for correctness checking
# ---------------------------------------------------------------------------
def _reference(t, x_nchw, params):
    del t
    x = x_nchw

    def conv(x, w, b):
        w_oihw = jnp.transpose(w, (3, 2, 0, 1))
        y = jax.lax.conv_general_dilated(
            x, w_oihw, window_strides=(1, 1), padding="SAME",
            dimension_numbers=("NCHW", "OIHW", "NCHW"))
        y = y + b.reshape(1, -1, 1, 1)
        return jnp.where(y >= 0, y, 0.2 * y)

    x = conv(x, params["w1"], params["b1"])
    if "w2" in params:
        x = conv(x, params["w2"], params["b2"])
    return x


if __name__ == "__main__":
    key = jax.random.PRNGKey(0)
    k_x, k_p, k_p1 = jax.random.split(key, 3)

    N, C, H, W = 2, 4, 16, 16
    dim, dim_hidden = C, 8  # dim_hidden != dim -> both convs of the Sequential

    x = jax.random.normal(k_x, (N, C, H, W), jnp.float32)
    t = jnp.float32(0.0)

    params = init_odefunc_params(k_p, dim, dim_hidden)

    # f32 compute path
    prepared = prepare_odefunc_params(params, W)
    out = jax.block_until_ready(odefunc_forward(t, x, prepared))
    ref = _reference(t, x, params)
    assert out.shape == (N, C, H, W)
    assert out.dtype == jnp.float32
    assert jnp.allclose(out, ref, atol=1e-4, rtol=1e-4), "f32 mismatch vs reference"

    # bf16 compute path (v6e / v7x): bf16 MXU inputs, f32 accum + f32 output.
    prepared_bf16 = prepare_odefunc_params(params, W, compute_dtype=jnp.bfloat16)
    out_bf16 = jax.block_until_ready(odefunc_forward(t, x, prepared_bf16))
    assert out_bf16.dtype == jnp.float32
    assert jnp.allclose(out_bf16, ref, atol=5e-2, rtol=5e-2), \
        "bf16 mismatch vs reference"

    # single-conv configuration (dim_hidden == dim)
    params1 = init_odefunc_params(k_p1, dim, None)
    prepared1 = prepare_odefunc_params(params1, W)
    out1 = jax.block_until_ready(odefunc_forward(t, x, prepared1))
    ref1 = _reference(t, x, params1)
    assert jnp.allclose(out1, ref1, atol=1e-4, rtol=1e-4), "1-conv mismatch vs reference"

    print("KERNEL_OK")
</pallas_src>

<mosaic_0001>
module attributes {stable_mosaic.version = 11 : i64} {
  func.func @kernel(%arg0: i32, %arg1: memref<2x16x64xf32, #tpu.memory_space<vmem>>, %arg2: memref<3x64x128xf32, #tpu.memory_space<vmem>>, %arg3: memref<1x128xf32, #tpu.memory_space<vmem>>, %arg4: memref<3x128x64xf32, #tpu.memory_space<vmem>>, %arg5: memref<1x64xf32, #tpu.memory_space<vmem>>, %arg6: memref<2x16x64xf32, #tpu.memory_space<vmem>>, %arg7: memref<48x64xf32, #tpu.memory_space<vmem>>, %arg8: memref<48x128xf32, #tpu.memory_space<vmem>>) attributes {dimension_semantics = [#tpu.dimension_semantics<parallel>], iteration_bounds = array<i64: 1>, scalar_prefetch = 0 : i64, scratch_operands = 2 : i64, tpu.core_type = #tpu.core_type<tc>, window_params = [{transform_indices = @transform_0, window_bounds = array<i64: 2, 16, 64>}, {pipeline_mode = #tpu.pipeline_mode<synchronous>, transform_indices = @transform_1, window_bounds = array<i64: 3, 64, 128>}, {pipeline_mode = #tpu.pipeline_mode<synchronous>, transform_indices = @transform_2, window_bounds = array<i64: 1, 128>}, {pipeline_mode = #tpu.pipeline_mode<synchronous>, transform_indices = @transform_3, window_bounds = array<i64: 3, 128, 64>}, {pipeline_mode = #tpu.pipeline_mode<synchronous>, transform_indices = @transform_4, window_bounds = array<i64: 1, 64>}, {transform_indices = @transform_5, window_bounds = array<i64: 2, 16, 64>}]} {
    %cst = arith.constant 0.000000e+00 : f32
    %0 = vector.broadcast %cst : f32 to vector<1x64xf32>
    %c0 = arith.constant 0 : index
    %c0_0 = arith.constant 0 : index
    %1 = vector.load %arg7[%c0, %c0_0] : memref<48x64xf32, #tpu.memory_space<vmem>>, vector<1x64xf32>
    tpu.vector_store %arg7[%c0, %c0_0], %0 {strides = array<i32>} : memref<48x64xf32, #tpu.memory_space<vmem>>, vector<1x64xf32>,
    %c17 = arith.constant 17 : index
    %c0_1 = arith.constant 0 : index
    %2 = vector.load %arg7[%c17, %c0_1] : memref<48x64xf32, #tpu.memory_space<vmem>>, vector<1x64xf32>
    tpu.vector_store %arg7[%c17, %c0_1], %0 {strides = array<i32>} : memref<48x64xf32, #tpu.memory_space<vmem>>, vector<1x64xf32>,
    %c0_2 = arith.constant 0 : index
    %c0_3 = arith.constant 0 : index
    %c0_4 = arith.constant 0 : index
    %3 = vector.load %arg1[%c0_2, %c0_3, %c0_4] : memref<2x16x64xf32, #tpu.memory_space<vmem>>, vector<1x16x64xf32>
    %4 = vector.shape_cast %3 : vector<1x16x64xf32> to vector<16x64xf32>
    %c1 = arith.constant 1 : index
    %c0_5 = arith.constant 0 : index
    %5 = vector.load %arg7[%c1, %c0_5] : memref<48x64xf32, #tpu.memory_space<vmem>>, vector<16x64xf32>
    tpu.vector_store %arg7[%c1, %c0_5], %4 {strides = array<i32>} : memref<48x64xf32, #tpu.memory_space<vmem>>, vector<16x64xf32>,
    %c24 = arith.constant 24 : index
    %c0_6 = arith.constant 0 : index
    %6 = vector.load %arg7[%c24, %c0_6] : memref<48x64xf32, #tpu.memory_space<vmem>>, vector<1x64xf32>
    tpu.vector_store %arg7[%c24, %c0_6], %0 {strides = array<i32>} : memref<48x64xf32, #tpu.memory_space<vmem>>, vector<1x64xf32>,
    %c41 = arith.constant 41 : index
    %c0_7 = arith.constant 0 : index
    %7 = vector.load %arg7[%c41, %c0_7] : memref<48x64xf32, #tpu.memory_space<vmem>>, vector<1x64xf32>
    tpu.vector_store %arg7[%c41, %c0_7], %0 {strides = array<i32>} : memref<48x64xf32, #tpu.memory_space<vmem>>, vector<1x64xf32>,
    %c1_8 = arith.constant 1 : index
    %c0_9 = arith.constant 0 : index
    %c0_10 = arith.constant 0 : index
    %8 = vector.load %arg1[%c1_8, %c0_9, %c0_10] : memref<2x16x64xf32, #tpu.memory_space<vmem>>, vector<1x16x64xf32>
    %9 = vector.shape_cast %8 : vector<1x16x64xf32> to vector<16x64xf32>
    %c25 = arith.constant 25 : index
    %c0_11 = arith.constant 0 : index
    %10 = vector.load %arg7[%c25, %c0_11] : memref<48x64xf32, #tpu.memory_space<vmem>>, vector<16x64xf32>
    tpu.vector_store %arg7[%c25, %c0_11], %9 {strides = array<i32>} : memref<48x64xf32, #tpu.memory_space<vmem>>, vector<16x64xf32>,
    %c0_12 = arith.constant 0 : index
    %c0_13 = arith.constant 0 : index
    %11 = vector.load %arg7[%c0_12, %c0_13] : memref<48x64xf32, #tpu.memory_space<vmem>>, vector<40x64xf32>
    %c0_14 = arith.constant 0 : index
    %c0_15 = arith.constant 0 : index
    %c0_16 = arith.constant 0 : index
    %12 = vector.load %arg2[%c0_14, %c0_15, %c0_16] : memref<3x64x128xf32, #tpu.memory_space<vmem>>, vector<1x64x128xf32>
    %13 = vector.shape_cast %12 : vector<1x64x128xf32> to vector<64x128xf32>
    %cst_17 = arith.constant dense<0.000000e+00> : vector<40x128xf32>
    %14 = tpu.matmul %11, %13, %cst_17 {dimension_numbers = #tpu.dot_dimension_numbers<[1], [0], [0], [1], [0, 0, 1, 1], [], []>} : vector<40x64xf32>, vector<64x128xf32>, vector<40x128xf32> -> vector<40x128xf32>
    %c1_18 = arith.constant 1 : index
    %c0_19 = arith.constant 0 : index
    %15 = vector.load %arg7[%c1_18, %c0_19] : memref<48x64xf32, #tpu.memory_space<vmem>>, vector<40x64xf32>
    %c1_20 = arith.constant 1 : index
    %c0_21 = arith.constant 0 : index
    %c0_22 = arith.constant 0 : index
    %16 = vector.load %arg2[%c1_20, %c0_21, %c0_22] : memref<3x64x128xf32, #tpu.memory_space<vmem>>, vector<1x64x128xf32>
    %17 = vector.shape_cast %16 : vector<1x64x128xf32> to vector<64x128xf32>
    %cst_23 = arith.constant dense<0.000000e+00> : vector<40x128xf32>
    %18 = tpu.matmul %15, %17, %cst_23 {dimension_numbers = #tpu.dot_dimension_numbers<[1], [0], [0], [1], [0, 0, 1, 1], [], []>} : vector<40x64xf32>, vector<64x128xf32>, vector<40x128xf32> -> vector<40x128xf32>
    %19 = arith.addf %14, %18 : vector<40x128xf32>
    %c2 = arith.constant 2 : index
    %c0_24 = arith.constant 0 : index
    %20 = vector.load %arg7[%c2, %c0_24] : memref<48x64xf32, #tpu.memory_space<vmem>>, vector<40x64xf32>
    %c2_25 = arith.constant 2 : index
    %c0_26 = arith.constant 0 : index
    %c0_27 = arith.constant 0 : index
    %21 = vector.load %arg2[%c2_25, %c0_26, %c0_27] : memref<3x64x128xf32, #tpu.memory_space<vmem>>, vector<1x64x128xf32>
    %22 = vector.shape_cast %21 : vector<1x64x128xf32> to vector<64x128xf32>
    %cst_28 = arith.constant dense<0.000000e+00> : vector<40x128xf32>
    %23 = tpu.matmul %20, %22, %cst_28 {dimension_numbers = #tpu.dot_dimension_numbers<[1], [0], [0], [1], [0, 0, 1, 1], [], []>} : vector<40x64xf32>, vector<64x128xf32>, vector<40x128xf32> -> vector<40x128xf32>
    %24 = arith.addf %19, %23 : vector<40x128xf32>
    %c0_29 = arith.constant 0 : index
    %c0_30 = arith.constant 0 : index
    %25 = vector.load %arg3[%c0_29, %c0_30] : memref<1x128xf32, #tpu.memory_space<vmem>>, vector<1x128xf32>
    %26 = vector.shape_cast %25 : vector<1x128xf32> to vector<128xf32>
    %27 = vector.shape_cast %26 : vector<128xf32> to vector<1x128xf32>
    %28 = vector.broadcast %27 : vector<1x128xf32> to vector<40x128xf32>
    %29 = arith.addf %24, %28 : vector<40x128xf32>
    %cst_31 = arith.constant 2.000000e-01 : f32
    %30 = vector.broadcast %cst_31 : f32 to vector<40x128xf32>
    %31 = arith.mulf %30, %29 : vector<40x128xf32>
    %32 = arith.maximumf %29, %31 : vector<40x128xf32>
    %cst_32 = arith.constant 0.000000e+00 : f32
    %33 = vector.broadcast %cst_32 : f32 to vector<1x128xf32>
    %c0_33 = arith.constant 0 : index
    %c0_34 = arith.constant 0 : index
    %34 = vector.load %arg8[%c0_33, %c0_34] : memref<48x128xf32, #tpu.memory_space<vmem>>, vector<1x128xf32>
    tpu.vector_store %arg8[%c0_33, %c0_34], %33 {strides = array<i32>} : memref<48x128xf32, #tpu.memory_space<vmem>>, vector<1x128xf32>,
    %c17_35 = arith.constant 17 : index
    %c0_36 = arith.constant 0 : index
    %35 = vector.load %arg8[%c17_35, %c0_36] : memref<48x128xf32, #tpu.memory_space<vmem>>, vector<1x128xf32>
    tpu.vector_store %arg8[%c17_35, %c0_36], %33 {strides = array<i32>} : memref<48x128xf32, #tpu.memory_space<vmem>>, vector<1x128xf32>,
    %36 = vector.extract_strided_slice %32 {offsets = [0, 0], sizes = [16, 128], strides = [1, 1]} : vector<40x128xf32> to vector<16x128xf32>
    %c1_37 = arith.constant 1 : index
    %c0_38 = arith.constant 0 : index
    %37 = vector.load %arg8[%c1_37, %c0_38] : memref<48x128xf32, #tpu.memory_space<vmem>>, vector<16x128xf32>
    tpu.vector_store %arg8[%c1_37, %c0_38], %36 {strides = array<i32>} : memref<48x128xf32, #tpu.memory_space<vmem>>, vector<16x128xf32>,
    %c24_39 = arith.constant 24 : index
    %c0_40 = arith.constant 0 : index
    %38 = vector.load %arg8[%c24_39, %c0_40] : memref<48x128xf32, #tpu.memory_space<vmem>>, vector<1x128xf32>
    tpu.vector_store %arg8[%c24_39, %c0_40], %33 {strides = array<i32>} : memref<48x128xf32, #tpu.memory_space<vmem>>, vector<1x128xf32>,
    %c41_41 = arith.constant 41 : index
    %c0_42 = arith.constant 0 : index
    %39 = vector.load %arg8[%c41_41, %c0_42] : memref<48x128xf32, #tpu.memory_space<vmem>>, vector<1x128xf32>
    tpu.vector_store %arg8[%c41_41, %c0_42], %33 {strides = array<i32>} : memref<48x128xf32, #tpu.memory_space<vmem>>, vector<1x128xf32>,
    %40 = vector.extract_strided_slice %32 {offsets = [24, 0], sizes = [16, 128], strides = [1, 1]} : vector<40x128xf32> to vector<16x128xf32>
    %c25_43 = arith.constant 25 : index
    %c0_44 = arith.constant 0 : index
    %41 = vector.load %arg8[%c25_43, %c0_44] : memref<48x128xf32, #tpu.memory_space<vmem>>, vector<16x128xf32>
    tpu.vector_store %arg8[%c25_43, %c0_44], %40 {strides = array<i32>} : memref<48x128xf32, #tpu.memory_space<vmem>>, vector<16x128xf32>,
    %c0_45 = arith.constant 0 : index
    %c0_46 = arith.constant 0 : index
    %42 = vector.load %arg8[%c0_45, %c0_46] : memref<48x128xf32, #tpu.memory_space<vmem>>, vector<40x128xf32>
    %c0_47 = arith.constant 0 : index
    %c0_48 = arith.constant 0 : index
    %c0_49 = arith.constant 0 : index
    %43 = vector.load %arg4[%c0_47, %c0_48, %c0_49] : memref<3x128x64xf32, #tpu.memory_space<vmem>>, vector<1x128x64xf32>
    %44 = vector.shape_cast %43 : vector<1x128x64xf32> to vector<128x64xf32>
    %cst_50 = arith.constant dense<0.000000e+00> : vector<40x64xf32>
    %45 = tpu.matmul %42, %44, %cst_50 {dimension_numbers = #tpu.dot_dimension_numbers<[1], [0], [0], [1], [0, 0, 1, 1], [], []>} : vector<40x128xf32>, vector<128x64xf32>, vector<40x64xf32> -> vector<40x64xf32>
    %c1_51 = arith.constant 1 : index
    %c0_52 = arith.constant 0 : index
    %46 = vector.load %arg8[%c1_51, %c0_52] : memref<48x128xf32, #tpu.memory_space<vmem>>, vector<40x128xf32>
    %c1_53 = arith.constant 1 : index
    %c0_54 = arith.constant 0 : index
    %c0_55 = arith.constant 0 : index
    %47 = vector.load %arg4[%c1_53, %c0_54, %c0_55] : memref<3x128x64xf32, #tpu.memory_space<vmem>>, vector<1x128x64xf32>
    %48 = vector.shape_cast %47 : vector<1x128x64xf32> to vector<128x64xf32>
    %cst_56 = arith.constant dense<0.000000e+00> : vector<40x64xf32>
    %49 = tpu.matmul %46, %48, %cst_56 {dimension_numbers = #tpu.dot_dimension_numbers<[1], [0], [0], [1], [0, 0, 1, 1], [], []>} : vector<40x128xf32>, vector<128x64xf32>, vector<40x64xf32> -> vector<40x64xf32>
    %50 = arith.addf %45, %49 : vector<40x64xf32>
    %c2_57 = arith.constant 2 : index
    %c0_58 = arith.constant 0 : index
    %51 = vector.load %arg8[%c2_57, %c0_58] : memref<48x128xf32, #tpu.memory_space<vmem>>, vector<40x128xf32>
    %c2_59 = arith.constant 2 : index
    %c0_60 = arith.constant 0 : index
    %c0_61 = arith.constant 0 : index
    %52 = vector.load %arg4[%c2_59, %c0_60, %c0_61] : memref<3x128x64xf32, #tpu.memory_space<vmem>>, vector<1x128x64xf32>
    %53 = vector.shape_cast %52 : vector<1x128x64xf32> to vector<128x64xf32>
    %cst_62 = arith.constant dense<0.000000e+00> : vector<40x64xf32>
    %54 = tpu.matmul %51, %53, %cst_62 {dimension_numbers = #tpu.dot_dimension_numbers<[1], [0], [0], [1], [0, 0, 1, 1], [], []>} : vector<40x128xf32>, vector<128x64xf32>, vector<40x64xf32> -> vector<40x64xf32>
    %55 = arith.addf %50, %54 : vector<40x64xf32>
    %c0_63 = arith.constant 0 : index
    %c0_64 = arith.constant 0 : index
    %56 = vector.load %arg5[%c0_63, %c0_64] : memref<1x64xf32, #tpu.memory_space<vmem>>, vector<1x64xf32>
    %57 = vector.shape_cast %56 : vector<1x64xf32> to vector<64xf32>
    %58 = vector.shape_cast %57 : vector<64xf32> to vector<1x64xf32>
    %59 = vector.broadcast %58 : vector<1x64xf32> to vector<40x64xf32>
    %60 = arith.addf %55, %59 : vector<40x64xf32>
    %cst_65 = arith.constant 2.000000e-01 : f32
    %61 = vector.broadcast %cst_65 : f32 to vector<40x64xf32>
    %62 = arith.mulf %61, %60 : vector<40x64xf32>
    %63 = arith.maximumf %60, %62 : vector<40x64xf32>
    %64 = vector.extract_strided_slice %63 {offsets = [0, 0], sizes = [16, 64], strides = [1, 1]} : vector<40x64xf32> to vector<16x64xf32>
    %c0_66 = arith.constant 0 : index
    %c0_67 = arith.constant 0 : index
    %c0_68 = arith.constant 0 : index
    %65 = vector.load %arg6[%c0_66, %c0_67, %c0_68] : memref<2x16x64xf32, #tpu.memory_space<vmem>>, vector<1x16x64xf32>
    %66 = vector.shape_cast %65 : vector<1x16x64xf32> to vector<16x64xf32>
    %67 = vector.shape_cast %64 : vector<16x64xf32> to vector<1x16x64xf32>
    tpu.vector_store %arg6[%c0_66, %c0_67, %c0_68], %67 {strides = array<i32>} : memref<2x16x64xf32, #tpu.memory_space<vmem>>, vector<1x16x64xf32>,
    %68 = vector.extract_strided_slice %63 {offsets = [24, 0], sizes = [16, 64], strides = [1, 1]} : vector<40x64xf32> to vector<16x64xf32>
    %c1_69 = arith.constant 1 : index
    %c0_70 = arith.constant 0 : index
    %c0_71 = arith.constant 0 : index
    %69 = vector.load %arg6[%c1_69, %c0_70, %c0_71] : memref<2x16x64xf32, #tpu.memory_space<vmem>>, vector<1x16x64xf32>
    %70 = vector.shape_cast %69 : vector<1x16x64xf32> to vector<16x64xf32>
    %71 = vector.shape_cast %68 : vector<16x64xf32> to vector<1x16x64xf32>
    tpu.vector_store %arg6[%c1_69, %c0_70, %c0_71], %71 {strides = array<i32>} : memref<2x16x64xf32, #tpu.memory_space<vmem>>, vector<1x16x64xf32>,
    return
  }
  func.func @transform_0(%arg0: i32) -> (i32, i32, i32) {
    %c0_i32 = arith.constant 0 : i32
    %c0_i32_0 = arith.constant 0 : i32
    %c0_i32_1 = arith.constant 0 : i32
    return %arg0, %c0_i32, %c0_i32_0 : i32, i32, i32
  }
  func.func @transform_1(%arg0: i32) -> (i32, i32, i32) {
    %c0_i32 = arith.constant 0 : i32
    %c0_i32_0 = arith.constant 0 : i32
    %c0_i32_1 = arith.constant 0 : i32
    %c0_i32_2 = arith.constant 0 : i32
    return %c0_i32, %c0_i32_0, %c0_i32_1 : i32, i32, i32
  }
  func.func @transform_2(%arg0: i32) -> (i32, i32) {
    %c0_i32 = arith.constant 0 : i32
    %c0_i32_0 = arith.constant 0 : i32
    %c0_i32_1 = arith.constant 0 : i32
    return %c0_i32, %c0_i32_0 : i32, i32
  }
  func.func @transform_3(%arg0: i32) -> (i32, i32, i32) {
    %c0_i32 = arith.constant 0 : i32
    %c0_i32_0 = arith.constant 0 : i32
    %c0_i32_1 = arith.constant 0 : i32
    %c0_i32_2 = arith.constant 0 : i32
    return %c0_i32, %c0_i32_0, %c0_i32_1 : i32, i32, i32
  }
  func.func @transform_4(%arg0: i32) -> (i32, i32) {
    %c0_i32 = arith.constant 0 : i32
    %c0_i32_0 = arith.constant 0 : i32
    %c0_i32_1 = arith.constant 0 : i32
    return %c0_i32, %c0_i32_0 : i32, i32
  }
  func.func @transform_5(%arg0: i32) -> (i32, i32, i32) {
    %c0_i32 = arith.constant 0 : i32
    %c0_i32_0 = arith.constant 0 : i32
    %c0_i32_1 = arith.constant 0 : i32
    return %arg0, %c0_i32, %c0_i32_0 : i32, i32, i32
  }
}

</mosaic_0001>

<llo_original>
// kernel: tpu_custom_call.1
$region0: #{tpu_custom_call.1}
  #allocation0 [shape = 'u32[]', space=smem, size = 0x4, offset = 0x4, fixed_abs, tag = 'smem constant byte address 0x4 - core index']
  #allocation1 [shape = 'u32[144,128]{1,0:T(1,128)}', space=vmem, size = 0x12000, scoped, tag = 'internal scratch']
  #allocation2 [shape = 'f32[48,64]{1,0:T(8,128)}', space=vmem, size = 0x6000, scoped, tag = 'scratch operand']
  #allocation3 [shape = 'f32[48,128]{1,0:T(8,128)}', space=vmem, size = 0x6000, scoped, tag = 'scratch operand']
  %s0 = inlined_call_operand.vmem [shape: f32[2,16,64], index: 0, kind: input, shape index: {}]
  %s1 = inlined_call_operand.vmem [shape: f32[3,64,128], index: 1, kind: input, shape index: {}]
  %s2 = inlined_call_operand.vmem [shape: f32[1,128], index: 2, kind: input, shape index: {}]
  %s3 = inlined_call_operand.vmem [shape: f32[3,128,64], index: 3, kind: input, shape index: {}]
  %s4 = inlined_call_operand.vmem [shape: f32[1,64], index: 4, kind: input, shape index: {}]
  %s5 = inlined_call_operand.hbm [shape: f32[2,16,64], index: 5, kind: output, shape index: {}]
  %s6 = sld [smem:[#allocation0]]
  $region30: #{tpu_custom_call.1} parent=0
    _
  %s8 = ssub.s32 1, %s6
  %s9 = scalar_select 0, %s8, %s6
  $region1: #{tpu_custom_call.1} parent=0
    #allocation4 [shape = 'u8[16384]{0}', space=vmem, size = 0x4000, scoped, tag = 'output window, operand 0, single buffered']
    #allocation5 [shape = 's32[1]{0}', space=sflag, size = 0x4, scoped, tag = 'scoped memory for tpu_custom_call.1']
    %10 = vsyncpa [#allocation5], 0
    // Predicated region
    $region2: #{tpu_custom_call.1} parent=1 // pred_check
      _
    $region3: #{tpu_custom_call.1} parent=1 // pred_check_branch
      %12 = sbr.rel (0) target = $region5
    $region4: #{tpu_custom_call.1} parent=1 // pred_region
      _
    $region5: #{tpu_custom_call.1} parent=1 // pred_fallthru
      _
    // Predicated region
    $region6: #{tpu_custom_call.1} parent=1 // pred_check
      _
    $region7: #{tpu_custom_call.1} parent=1 // pred_check_branch
      %14 = sbr.rel (0) target = $region9
    $region8: #{tpu_custom_call.1} parent=1 // pred_region
      _
    $region9: #{tpu_custom_call.1} parent=1 // pred_fallthru
      _
    // Predicated region
    $region10: #{tpu_custom_call.1} parent=1 // pred_check
      _
    $region11: #{tpu_custom_call.1} parent=1 // pred_check_branch
      %16 = sbr.rel (0) target = $region13
    $region12: #{tpu_custom_call.1} parent=1 // pred_region
      _
    $region13: #{tpu_custom_call.1} parent=1 // pred_fallthru
      _
    // Predicated region
    $region14: #{tpu_custom_call.1} parent=1 // pred_check
      _
    $region15: #{tpu_custom_call.1} parent=1 // pred_check_branch
      %18 = sbr.rel (0) target = $region17
    $region16: #{tpu_custom_call.1} parent=1 // pred_region
      _
    $region17: #{tpu_custom_call.1} parent=1 // pred_fallthru
      _
    // Predicated region
    $region18: #{tpu_custom_call.1} parent=1 // pred_check
      _
    $region19: #{tpu_custom_call.1} parent=1 // pred_check_branch
      %20 = sbr.rel (0) target = $region21
    $region20: #{tpu_custom_call.1} parent=1 // pred_region
      _
    $region21: #{tpu_custom_call.1} parent=1 // pred_fallthru
      _
    %vm21 = vcmask 516096
    %22 = vst.msk [vmem:[#allocation2] sm:$0x1] %vm21, 0.0
    %23 = vst.msk [vmem:[#allocation2 + $0x11] sm:$0x1] %vm21, 0.0
    %v24 = vld [vmem:[%s0] sm:$0xff]
    %v25 = vld [vmem:[%s0 + $0x8] sm:$0xff]
    %vm26 = vcmask 523264
    %27 = vst.msk [vmem:[#allocation2 + $0x1] sm:$0xff] %vm26, %v24
    %28 = vst.msk [vmem:[#allocation2 + $0x9] sm:$0xff] %vm26, %v25
    %29 = vst.msk [vmem:[#allocation2 + $0x18] sm:$0x1] %vm21, 0.0
    %30 = vst.msk [vmem:[#allocation2 + $0x29] sm:$0x1] %vm21, 0.0
    %s31 = scalar_lea.vmem %s0, 16
    %v32 = vld [vmem:[%s31] sm:$0xff]
    %v33 = vld [vmem:[%s31 + $0x8] sm:$0xff]
    %34 = vst.msk [vmem:[#allocation2 + $0x19] sm:$0xff] %vm26, %v32
    %35 = vst.msk [vmem:[#allocation2 + $0x21] sm:$0xff] %vm26, %v33
    %v36 = vld [vmem:[#allocation2] sm:$0xff]
    %v37 = vld [vmem:[#allocation2 + $0x8] sm:$0xff]
    %v38 = vld [vmem:[#allocation2 + $0x10] sm:$0xff]
    %v39 = vld [vmem:[#allocation2 + $0x18] sm:$0xff]
    %v40 = vld [vmem:[#allocation2 + $0x20] sm:$0xff]
    %v41 = vld [vmem:[%s1] sm:$0xff]
    %v42 = vld [vmem:[%s1 + $0x8] sm:$0xff]
    %v43 = vld [vmem:[%s1 + $0x10] sm:$0xff]
    %v44 = vld [vmem:[%s1 + $0x18] sm:$0xff]
    %v45 = vld [vmem:[%s1 + $0x20] sm:$0xff]
    %v46 = vld [vmem:[%s1 + $0x28] sm:$0xff]
    %v47 = vld [vmem:[%s1 + $0x30] sm:$0xff]
    %v48 = vld [vmem:[%s1 + $0x38] sm:$0xff]
    %v49 = vld [vmem:[#allocation2 + $0x1] sm:$0xff]
    %v50 = vld [vmem:[#allocation2 + $0x9] sm:$0xff]
    %v51 = vld [vmem:[#allocation2 + $0x11] sm:$0xff]
    %v52 = vld [vmem:[#allocation2 + $0x19] sm:$0xff]
    %v53 = vld [vmem:[#allocation2 + $0x21] sm:$0xff]
    %s54 = scalar_lea.vmem %s1, 64
    %v55 = vld [vmem:[%s54] sm:$0xff]
    %v56 = vld [vmem:[%s54 + $0x8] sm:$0xff]
    %v57 = vld [vmem:[%s54 + $0x10] sm:$0xff]
    %v58 = vld [vmem:[%s54 + $0x18] sm:$0xff]
    %v59 = vld [vmem:[%s54 + $0x20] sm:$0xff]
    %v60 = vld [vmem:[%s54 + $0x28] sm:$0xff]
    %v61 = vld [vmem:[%s54 + $0x30] sm:$0xff]
    %v62 = vld [vmem:[%s54 + $0x38] sm:$0xff]
    %v64 = vsel %vm26, %v49, 0
    %v67 = vsel %vm26, %v50, 0
    %v70 = vsel %vm26, %v51, 0
    %v73 = vsel %vm26, %v52, 0
    %v76 = vsel %vm26, %v53, 0
    %78 = vmatprep.subr.mxu0 0.0
    %79 = vmatpush1.msra.mxu0 %v55
    %80 = vmatprep.subr.mxu0 0.0
    %81 = vmatpush1.msra.mxu0 %v56
    %82 = vmatprep.subr.mxu0 0.0
    %83 = vmatpush1.msra.mxu0 %v57
    %84 = vmatprep.subr.mxu0 0.0
    %85 = vmatpush1.msra.mxu0 %v58
    %86 = vmatprep.subr.mxu0 0.0
    %87 = vmatpush1.msra.mxu0 %v59
    %88 = vmatprep.subr.mxu0 0.0
    %89 = vmatpush1.msra.mxu0 %v60
    %90 = vmatprep.subr.mxu0 0.0
    %91 = vmatpush1.msra.mxu0 %v61
    %92 = vmatprep.subr.mxu0 0.0
    %93 = vmatpush1.msra.mxu0 %v62
    %94 = vmatprep.subr.mxu0 0.0
    %95 = vmatpush1.msra.mxu0 0.0
    %96 = vmatprep.subr.mxu0 0.0
    %97 = vmatpush1.msra.mxu0 0.0
    %98 = vmatprep.subr.mxu0 0.0
    %99 = vmatpush1.msra.mxu0 0.0
    %100 = vmatprep.subr.mxu0 0.0
    %101 = vmatpush1.msra.mxu0 0.0
    %102 = vmatprep.subr.mxu0 0.0
    %103 = vmatpush1.msra.mxu0 0.0
    %104 = vmatprep.subr.mxu0 0.0
    %105 = vmatpush1.msra.mxu0 0.0
    %106 = vmatprep.subr.mxu0 0.0
    %107 = vmatpush1.msra.mxu0 0.0
    %108 = vmatprep.subr.mxu0 0.0
    %109 = vmatpush1.msra.mxu0 0.0
    %110 = vmatprep.subr.mxu0 0.0
    %111 = vmatpush1.msra.mxu0 0.0
    %112 = vmatprep.subr.mxu0 0.0
    %113 = vmatpush1.msra.mxu0 0.0
    %114 = vmatprep.subr.mxu0 0.0
    %115 = vmatpush1.msra.mxu0 0.0
    %116 = vmatprep.subr.mxu0 0.0
    %117 = vmatpush1.msra.mxu0 0.0
    %118 = vmatprep.subr.mxu0 0.0
    %119 = vmatpush1.msra.mxu0 0.0
    %120 = vmatprep.subr.mxu0 0.0
    %121 = vmatpush1.msra.mxu0 0.0
    %122 = vmatprep.subr.mxu0 0.0
    %123 = vmatpush1.msra.mxu0 0.0
    %124 = vmatprep.subr.mxu0 0.0
    %125 = vmatpush1.msra.mxu0 0.0
    %126 = vmatprep.subr.mxu0 0.0
    %127 = vmatpush1.msra.mxu0 0.0
    %128 = vmatprep.subr.mxu0 0.0
    %129 = vmatpush1.msra.mxu0 0.0
    %130 = vmatprep.subr.mxu0 0.0
    %131 = vmatpush1.msra.mxu0 0.0
    %132 = vmatprep.subr.mxu0 0.0
    %133 = vmatpush1.msra.mxu0 0.0
    %134 = vmatprep.subr.mxu0 0.0
    %135 = vmatpush1.msra.mxu0 0.0
    %136 = vmatprep.subr.mxu0 0.0
    %137 = vmatpush1.msra.mxu0 0.0
    %138 = vmatprep.subr.mxu0 0.0
    %139 = vmatpush1.msra.mxu0 0.0
    %140 = vmatprep.subr.mxu0 0.0
    %141 = vmatpush1.msra.mxu0 0.0
    %142 = vmatprep.mubr.f32.mxu0 0.0
    %143 = vmatmul.mubr.f32.gmra.mrb[0].mxu0 %v64
    %v144 = vpop.f32.mrb[0].mxu0
    %v145 = vadd.f32 0.0, %v144
    %v146 = vpop.f32.mrb[0].mxu0
    %147 = vmatprep.mubr.f32.mxu0 0.0
    %148 = vmatmul.mubr.f32.gmra.mrb[0].mxu0 %v67
    %v149 = vpop.f32.mrb[0].mxu0
    %v150 = vadd.f32 0.0, %v149
    %v151 = vpop.f32.mrb[0].mxu0
    %152 = vmatprep.mubr.f32.mxu0 0.0
    %153 = vmatmul.mubr.f32.gmra.mrb[0].mxu0 %v70
    %v154 = vpop.f32.mrb[0].mxu0
    %v155 = vpop.f32.mrb[0].mxu0
    %156 = vmatprep.mubr.f32.mxu0 0.0
    %157 = vmatmul.mubr.f32.gmra.mrb[0].mxu0 %v73
    %v158 = vpop.f32.mrb[0].mxu0
    %v159 = vadd.f32 0.0, %v158
    %v160 = vpop.f32.mrb[0].mxu0
    %161 = vmatprep.mubr.f32.mxu0 0.0
    %162 = vmatmul.mubr.f32.gmra.mrb[0].mxu0 %v76
    %v163 = vpop.f32.mrb[0].mxu0
    %v164 = vadd.f32 0.0, %v163
    %v165 = vpop.f32.mrb[0].mxu0
    %166 = vdwg.mxu0
    %v168 = vsel %vm26, %v36, 0
    %v171 = vsel %vm26, %v37, 0
    %v174 = vsel %vm26, %v38, 0
    %v177 = vsel %vm26, %v39, 0
    %v180 = vsel %vm26, %v40, 0
    %182 = vmatprep.subr.mxu0 0.0
    %183 = vmatpush1.msra.mxu0 %v41
    %184 = vmatprep.subr.mxu0 0.0
    %185 = vmatpush1.msra.mxu0 %v42
    %186 = vmatprep.subr.mxu0 0.0
    %187 = vmatpush1.msra.mxu0 %v43
    %188 = vmatprep.subr.mxu0 0.0
    %189 = vmatpush1.msra.mxu0 %v44
    %190 = vmatprep.subr.mxu0 0.0
    %191 = vmatpush1.msra.mxu0 %v45
    %192 = vmatprep.subr.mxu0 0.0
    %193 = vmatpush1.msra.mxu0 %v46
    %194 = vmatprep.subr.mxu0 0.0
    %195 = vmatpush1.msra.mxu0 %v47
    %196 = vmatprep.subr.mxu0 0.0
    %197 = vmatpush1.msra.mxu0 %v48
    %198 = vmatprep.subr.mxu0 0.0
    %199 = vmatpush1.msra.mxu0 0.0
    %200 = vmatprep.subr.mxu0 0.0
    %201 = vmatpush1.msra.mxu0 0.0
    %202 = vmatprep.subr.mxu0 0.0
    %203 = vmatpush1.msra.mxu0 0.0
    %204 = vmatprep.subr.mxu0 0.0
    %205 = vmatpush1.msra.mxu0 0.0
    %206 = vmatprep.subr.mxu0 0.0
    %207 = vmatpush1.msra.mxu0 0.0
    %208 = vmatprep.subr.mxu0 0.0
    %209 = vmatpush1.msra.mxu0 0.0
    %210 = vmatprep.subr.mxu0 0.0
    %211 = vmatpush1.msra.mxu0 0.0
    %212 = vmatprep.subr.mxu0 0.0
    %213 = vmatpush1.msra.mxu0 0.0
    %214 = vmatprep.subr.mxu0 0.0
    %215 = vmatpush1.msra.mxu0 0.0
    %216 = vmatprep.subr.mxu0 0.0
    %217 = vmatpush1.msra.mxu0 0.0
    %218 = vmatprep.subr.mxu0 0.0
    %219 = vmatpush1.msra.mxu0 0.0
    %220 = vmatprep.subr.mxu0 0.0
    %221 = vmatpush1.msra.mxu0 0.0
    %222 = vmatprep.subr.mxu0 0.0
    %223 = vmatpush1.msra.mxu0 0.0
    %224 = vmatprep.subr.mxu0 0.0
    %225 = vmatpush1.msra.mxu0 0.0
    %226 = vmatprep.subr.mxu0 0.0
    %227 = vmatpush1.msra.mxu0 0.0
    %228 = vmatprep.subr.mxu0 0.0
    %229 = vmatpush1.msra.mxu0 0.0
    %230 = vmatprep.subr.mxu0 0.0
    %231 = vmatpush1.msra.mxu0 0.0
    %232 = vmatprep.subr.mxu0 0.0
    %233 = vmatpush1.msra.mxu0 0.0
    %234 = vmatprep.subr.mxu0 0.0
    %235 = vmatpush1.msra.mxu0 0.0
    %236 = vmatprep.subr.mxu0 0.0
    %237 = vmatpush1.msra.mxu0 0.0
    %238 = vmatprep.subr.mxu0 0.0
    %239 = vmatpush1.msra.mxu0 0.0
    %240 = vmatprep.subr.mxu0 0.0
    %241 = vmatpush1.msra.mxu0 0.0
    %242 = vmatprep.subr.mxu0 0.0
    %243 = vmatpush1.msra.mxu0 0.0
    %244 = vmatprep.subr.mxu0 0.0
    %245 = vmatpush1.msra.mxu0 0.0
    %246 = vmatprep.mubr.f32.mxu0 0.0
    %247 = vmatmul.mubr.f32.gmra.mrb[0].mxu0 %v168
    %v248 = vpop.f32.mrb[0].mxu0
    %v249 = vadd.f32 %v145, %v248
    %v250 = vpop.f32.mrb[0].mxu0
    %251 = vmatprep.mubr.f32.mxu0 0.0
    %252 = vmatmul.mubr.f32.gmra.mrb[0].mxu0 %v171
    %v253 = vpop.f32.mrb[0].mxu0
    %v254 = vadd.f32 %v150, %v253
    %v255 = vpop.f32.mrb[0].mxu0
    %256 = vmatprep.mubr.f32.mxu0 0.0
    %257 = vmatmul.mubr.f32.gmra.mrb[0].mxu0 %v174
    %v258 = vpop.f32.mrb[0].mxu0
    %v259 = vpop.f32.mrb[0].mxu0
    %260 = vmatprep.mubr.f32.mxu0 0.0
    %261 = vmatmul.mubr.f32.gmra.mrb[0].mxu0 %v177
    %v262 = vpop.f32.mrb[0].mxu0
    %v263 = vadd.f32 %v159, %v262
    %v264 = vpop.f32.mrb[0].mxu0
    %265 = vmatprep.mubr.f32.mxu0 0.0
    %266 = vmatmul.mubr.f32.gmra.mrb[0].mxu0 %v180
    %v267 = vpop.f32.mrb[0].mxu0
    %v268 = vadd.f32 %v164, %v267
    %v269 = vpop.f32.mrb[0].mxu0
    %270 = vdwg.mxu0
    %v271 = vld [vmem:[#allocation2 + $0x2] sm:$0xff]
    %v272 = vld [vmem:[#allocation2 + $0xa] sm:$0xff]
    %v273 = vld [vmem:[#allocation2 + $0x12] sm:$0xff]
    %v274 = vld [vmem:[#allocation2 + $0x1a] sm:$0xff]
    %v275 = vld [vmem:[#allocation2 + $0x22] sm:$0xff]
    %s276 = scalar_lea.vmem %s1, 128
    %v277 = vld [vmem:[%s276] sm:$0xff]
    %v278 = vld [vmem:[%s276 + $0x8] sm:$0xff]
    %v279 = vld [vmem:[%s276 + $0x10] sm:$0xff]
    %v280 = vld [vmem:[%s276 + $0x18] sm:$0xff]
    %v281 = vld [vmem:[%s276 + $0x20] sm:$0xff]
    %v282 = vld [vmem:[%s276 + $0x28] sm:$0xff]
    %v283 = vld [vmem:[%s276 + $0x30] sm:$0xff]
    %v284 = vld [vmem:[%s276 + $0x38] sm:$0xff]
    %v286 = vsel %vm26, %v271, 0
    %v289 = vsel %vm26, %v272, 0
    %v292 = vsel %vm26, %v273, 0
    %v295 = vsel %vm26, %v274, 0
    %v298 = vsel %vm26, %v275, 0
    %300 = vmatprep.subr.mxu0 0.0
    %301 = vmatpush1.msra.mxu0 %v277
    %302 = vmatprep.subr.mxu0 0.0
    %303 = vmatpush1.msra.mxu0 %v278
    %304 = vmatprep.subr.mxu0 0.0
    %305 = vmatpush1.msra.mxu0 %v279
    %306 = vmatprep.subr.mxu0 0.0
    %307 = vmatpush1.msra.mxu0 %v280
    %308 = vmatprep.subr.mxu0 0.0
    %309 = vmatpush1.msra.mxu0 %v281
    %310 = vmatprep.subr.mxu0 0.0
    %311 = vmatpush1.msra.mxu0 %v282
    %312 = vmatprep.subr.mxu0 0.0
    %313 = vmatpush1.msra.mxu0 %v283
    %314 = vmatprep.subr.mxu0 0.0
    %315 = vmatpush1.msra.mxu0 %v284
    %316 = vmatprep.subr.mxu0 0.0
    %317 = vmatpush1.msra.mxu0 0.0
    %318 = vmatprep.subr.mxu0 0.0
    %319 = vmatpush1.msra.mxu0 0.0
    %320 = vmatprep.subr.mxu0 0.0
    %321 = vmatpush1.msra.mxu0 0.0
    %322 = vmatprep.subr.mxu0 0.0
    %323 = vmatpush1.msra.mxu0 0.0
    %324 = vmatprep.subr.mxu0 0.0
    %325 = vmatpush1.msra.mxu0 0.0
    %326 = vmatprep.subr.mxu0 0.0
    %327 = vmatpush1.msra.mxu0 0.0
    %328 = vmatprep.subr.mxu0 0.0
    %329 = vmatpush1.msra.mxu0 0.0
    %330 = vmatprep.subr.mxu0 0.0
    %331 = vmatpush1.msra.mxu0 0.0
    %332 = vmatprep.subr.mxu0 0.0
    %333 = vmatpush1.msra.mxu0 0.0
    %334 = vmatprep.subr.mxu0 0.0
    %335 = vmatpush1.msra.mxu0 0.0
    %336 = vmatprep.subr.mxu0 0.0
    %337 = vmatpush1.msra.mxu0 0.0
    %338 = vmatprep.subr.mxu0 0.0
    %339 = vmatpush1.msra.mxu0 0.0
    %340 = vmatprep.subr.mxu0 0.0
    %341 = vmatpush1.msra.mxu0 0.0
    %342 = vmatprep.subr.mxu0 0.0
    %343 = vmatpush1.msra.mxu0 0.0
    %344 = vmatprep.subr.mxu0 0.0
    %345 = vmatpush1.msra.mxu0 0.0
    %346 = vmatprep.subr.mxu0 0.0
    %347 = vmatpush1.msra.mxu0 0.0
    %348 = vmatprep.subr.mxu0 0.0
    %349 = vmatpush1.msra.mxu0 0.0
    %350 = vmatprep.subr.mxu0 0.0
    %351 = vmatpush1.msra.mxu0 0.0
    %352 = vmatprep.subr.mxu0 0.0
    %353 = vmatpush1.msra.mxu0 0.0
    %354 = vmatprep.subr.mxu0 0.0
    %355 = vmatpush1.msra.mxu0 0.0
    %356 = vmatprep.subr.mxu0 0.0
    %357 = vmatpush1.msra.mxu0 0.0
    %358 = vmatprep.subr.mxu0 0.0
    %359 = vmatpush1.msra.mxu0 0.0
    %360 = vmatprep.subr.mxu0 0.0
    %361 = vmatpush1.msra.mxu0 0.0
    %362 = vmatprep.subr.mxu0 0.0
    %363 = vmatpush1.msra.mxu0 0.0
    %364 = vmatprep.mubr.f32.mxu0 0.0
    %365 = vmatmul.mubr.f32.gmra.mrb[0].mxu0 %v286
    %v366 = vpop.f32.mrb[0].mxu0
    %v367 = vadd.f32 0.0, %v366
    %v368 = vpop.f32.mrb[0].mxu0
    %369 = vmatprep.mubr.f32.mxu0 0.0
    %370 = vmatmul.mubr.f32.gmra.mrb[0].mxu0 %v289
    %v371 = vpop.f32.mrb[0].mxu0
    %v372 = vadd.f32 0.0, %v371
    %v373 = vpop.f32.mrb[0].mxu0
    %374 = vmatprep.mubr.f32.mxu0 0.0
    %375 = vmatmul.mubr.f32.gmra.mrb[0].mxu0 %v292
    %v376 = vpop.f32.mrb[0].mxu0
    %v377 = vpop.f32.mrb[0].mxu0
    %378 = vmatprep.mubr.f32.mxu0 0.0
    %379 = vmatmul.mubr.f32.gmra.mrb[0].mxu0 %v295
    %v380 = vpop.f32.mrb[0].mxu0
    %v381 = vadd.f32 0.0, %v380
    %v382 = vpop.f32.mrb[0].mxu0
    %383 = vmatprep.mubr.f32.mxu0 0.0
    %384 = vmatmul.mubr.f32.gmra.mrb[0].mxu0 %v298
    %v385 = vpop.f32.mrb[0].mxu0
    %v386 = vadd.f32 0.0, %v385
    %v387 = vpop.f32.mrb[0].mxu0
    %388 = vdwg.mxu0
    %v389 = vadd.f32 %v249, %v367
    %v390 = vadd.f32 %v254, %v372
    %v391 = vadd.f32 %v263, %v381
    %v392 = vadd.f32 %v268, %v386
    %v393 = vld [vmem:[%s2] sm:$0x1]
    %v395 = vlaneseq
    %v396 = vshrl.u32 %v395, 7
    %v397 = vsub.s32 0, %v396
    %v398 = vrot.slane %v393, %v397
    %v400 = vadd.f32 %v389, %v398
    %v401 = vadd.f32 %v390, %v398
    %v402 = vadd.f32 %v391, %v398
    %v403 = vadd.f32 %v392, %v398
    %v404 = vmul.f32 %v400, 0.2
    %v405 = vmul.f32 %v401, 0.2
    %v406 = vmul.f32 %v402, 0.2
    %v407 = vmul.f32 %v403, 0.2
    %v408 = vmax.f32 %v400, %v404
    %v409 = vmax.f32 %v401, %v405
    %v410 = vmax.f32 %v402, %v406
    %v411 = vmax.f32 %v403, %v407
    %412 = vst [vmem:[#allocation3] sm:$0x1] 0.0
    %413 = vst [vmem:[#allocation3 + $0x11] sm:$0x1] 0.0
    %414 = vst [vmem:[#allocation3 + $0x1] sm:$0xff] %v408
    %415 = vst [vmem:[#allocation3 + $0x9] sm:$0xff] %v409
    %416 = vst [vmem:[#allocation3 + $0x18] sm:$0x1] 0.0
    %417 = vst [vmem:[#allocation3 + $0x29] sm:$0x1] 0.0
    %418 = vst [vmem:[#allocation3 + $0x19] sm:$0xff] %v410
    %419 = vst [vmem:[#allocation3 + $0x21] sm:$0xff] %v411
    %v420 = vld [vmem:[#allocation3] sm:$0xff]
    %v421 = vld [vmem:[#allocation3 + $0x8] sm:$0xff]
    %v422 = vld [vmem:[#allocation3 + $0x10] sm:$0xff]
    %v423 = vld [vmem:[#allocation3 + $0x18] sm:$0xff]
    %v424 = vld [vmem:[#allocation3 + $0x20] sm:$0xff]
    %v425 = vld [vmem:[%s3] sm:$0xff]
    %v426 = vld [vmem:[%s3 + $0x8] sm:$0xff]
    %v427 = vld [vmem:[%s3 + $0x10] sm:$0xff]
    %v428 = vld [vmem:[%s3 + $0x18] sm:$0xff]
    %v429 = vld [vmem:[%s3 + $0x20] sm:$0xff]
    %v430 = vld [vmem:[%s3 + $0x28] sm:$0xff]
    %v431 = vld [vmem:[%s3 + $0x30] sm:$0xff]
    %v432 = vld [vmem:[%s3 + $0x38] sm:$0xff]
    %v433 = vld [vmem:[%s3 + $0x40] sm:$0xff]
    %v434 = vld [vmem:[%s3 + $0x48] sm:$0xff]
    %v435 = vld [vmem:[%s3 + $0x50] sm:$0xff]
    %v436 = vld [vmem:[%s3 + $0x58] sm:$0xff]
    %v437 = vld [vmem:[%s3 + $0x60] sm:$0xff]
    %v438 = vld [vmem:[%s3 + $0x68] sm:$0xff]
    %v439 = vld [vmem:[%s3 + $0x70] sm:$0xff]
    %v440 = vld [vmem:[%s3 + $0x78] sm:$0xff]
    %v441 = vld [vmem:[#allocation3 + $0x1] sm:$0xff]
    %v442 = vld [vmem:[#allocation3 + $0x9] sm:$0xff]
    %v443 = vld [vmem:[#allocation3 + $0x11] sm:$0xff]
    %v444 = vld [vmem:[#allocation3 + $0x19] sm:$0xff]
    %v445 = vld [vmem:[#allocation3 + $0x21] sm:$0xff]
    %s446 = scalar_lea.vmem %s3, 128
    %v447 = vld [vmem:[%s446] sm:$0xff]
    %v448 = vld [vmem:[%s446 + $0x8] sm:$0xff]
    %v449 = vld [vmem:[%s446 + $0x10] sm:$0xff]
    %v450 = vld [vmem:[%s446 + $0x18] sm:$0xff]
    %v451 = vld [vmem:[%s446 + $0x20] sm:$0xff]
    %v452 = vld [vmem:[%s446 + $0x28] sm:$0xff]
    %v453 = vld [vmem:[%s446 + $0x30] sm:$0xff]
    %v454 = vld [vmem:[%s446 + $0x38] sm:$0xff]
    %v455 = vld [vmem:[%s446 + $0x40] sm:$0xff]
    %v456 = vld [vmem:[%s446 + $0x48] sm:$0xff]
    %v457 = vld [vmem:[%s446 + $0x50] sm:$0xff]
    %v458 = vld [vmem:[%s446 + $0x58] sm:$0xff]
    %v459 = vld [vmem:[%s446 + $0x60] sm:$0xff]
    %v460 = vld [vmem:[%s446 + $0x68] sm:$0xff]
    %v461 = vld [vmem:[%s446 + $0x70] sm:$0xff]
    %v462 = vld [vmem:[%s446 + $0x78] sm:$0xff]
    %463 = vmatprep.subr.mxu0 0.0
    %464 = vmatpush1.msra.mxu0 %v447
    %465 = vmatprep.subr.mxu0 0.0
    %466 = vmatpush1.msra.mxu0 %v448
    %467 = vmatprep.subr.mxu0 0.0
    %468 = vmatpush1.msra.mxu0 %v449
    %469 = vmatprep.subr.mxu0 0.0
    %470 = vmatpush1.msra.mxu0 %v450
    %471 = vmatprep.subr.mxu0 0.0
    %472 = vmatpush1.msra.mxu0 %v451
    %473 = vmatprep.subr.mxu0 0.0
    %474 = vmatpush1.msra.mxu0 %v452
    %475 = vmatprep.subr.mxu0 0.0
    %476 = vmatpush1.msra.mxu0 %v453
    %477 = vmatprep.subr.mxu0 0.0
    %478 = vmatpush1.msra.mxu0 %v454
    %479 = vmatprep.subr.mxu0 0.0
    %480 = vmatpush1.msra.mxu0 %v455
    %481 = vmatprep.subr.mxu0 0.0
    %482 = vmatpush1.msra.mxu0 %v456
    %483 = vmatprep.subr.mxu0 0.0
    %484 = vmatpush1.msra.mxu0 %v457
    %485 = vmatprep.subr.mxu0 0.0
    %486 = vmatpush1.msra.mxu0 %v458
    %487 = vmatprep.subr.mxu0 0.0
    %488 = vmatpush1.msra.mxu0 %v459
    %489 = vmatprep.subr.mxu0 0.0
    %490 = vmatpush1.msra.mxu0 %v460
    %491 = vmatprep.subr.mxu0 0.0
    %492 = vmatpush1.msra.mxu0 %v461
    %493 = vmatprep.subr.mxu0 0.0
    %494 = vmatpush1.msra.mxu0 %v462
    %495 = vmatprep.subr.mxu0 0.0
    %496 = vmatpush1.msra.mxu0 0.0
    %497 = vmatprep.subr.mxu0 0.0
    %498 = vmatpush1.msra.mxu0 0.0
    %499 = vmatprep.subr.mxu0 0.0
    %500 = vmatpush1.msra.mxu0 0.0
    %501 = vmatprep.subr.mxu0 0.0
    %502 = vmatpush1.msra.mxu0 0.0
    %503 = vmatprep.subr.mxu0 0.0
    %504 = vmatpush1.msra.mxu0 0.0
    %505 = vmatprep.subr.mxu0 0.0
    %506 = vmatpush1.msra.mxu0 0.0
    %507 = vmatprep.subr.mxu0 0.0
    %508 = vmatpush1.msra.mxu0 0.0
    %509 = vmatprep.subr.mxu0 0.0
    %510 = vmatpush1.msra.mxu0 0.0
    %511 = vmatprep.subr.mxu0 0.0
    %512 = vmatpush1.msra.mxu0 0.0
    %513 = vmatprep.subr.mxu0 0.0
    %514 = vmatpush1.msra.mxu0 0.0
    %515 = vmatprep.subr.mxu0 0.0
    %516 = vmatpush1.msra.mxu0 0.0
    %517 = vmatprep.subr.mxu0 0.0
    %518 = vmatpush1.msra.mxu0 0.0
    %519 = vmatprep.subr.mxu0 0.0
    %520 = vmatpush1.msra.mxu0 0.0
    %521 = vmatprep.subr.mxu0 0.0
    %522 = vmatpush1.msra.mxu0 0.0
    %523 = vmatprep.subr.mxu0 0.0
    %524 = vmatpush1.msra.mxu0 0.0
    %525 = vmatprep.subr.mxu0 0.0
    %526 = vmatpush1.msra.mxu0 0.0
    %527 = vmatprep.mubr.f32.mxu0 0.0
    %528 = vmatmul.mubr.f32.gmra.mrb[0].mxu0 %v441
    %v529 = vpop.f32.mrb[0].mxu0
    %v530 = vadd.f32 0.0, %v529
    %v531 = vpop.f32.mrb[0].mxu0
    %532 = vmatprep.mubr.f32.mxu0 0.0
    %533 = vmatmul.mubr.f32.gmra.mrb[0].mxu0 %v442
    %v534 = vpop.f32.mrb[0].mxu0
    %v535 = vadd.f32 0.0, %v534
    %v536 = vpop.f32.mrb[0].mxu0
    %537 = vmatprep.mubr.f32.mxu0 0.0
    %538 = vmatmul.mubr.f32.gmra.mrb[0].mxu0 %v443
    %v539 = vpop.f32.mrb[0].mxu0
    %v540 = vpop.f32.mrb[0].mxu0
    %541 = vmatprep.mubr.f32.mxu0 0.0
    %542 = vmatmul.mubr.f32.gmra.mrb[0].mxu0 %v444
    %v543 = vpop.f32.mrb[0].mxu0
    %v544 = vadd.f32 0.0, %v543
    %v545 = vpop.f32.mrb[0].mxu0
    %546 = vmatprep.mubr.f32.mxu0 0.0
    %547 = vmatmul.mubr.f32.gmra.mrb[0].mxu0 %v445
    %v548 = vpop.f32.mrb[0].mxu0
    %v549 = vadd.f32 0.0, %v548
    %v550 = vpop.f32.mrb[0].mxu0
    %551 = vdwg.mxu0
    %552 = vmatprep.subr.mxu0 0.0
    %553 = vmatpush1.msra.mxu0 %v425
    %554 = vmatprep.subr.mxu0 0.0
    %555 = vmatpush1.msra.mxu0 %v426
    %556 = vmatprep.subr.mxu0 0.0
    %557 = vmatpush1.msra.mxu0 %v427
    %558 = vmatprep.subr.mxu0 0.0
    %559 = vmatpush1.msra.mxu0 %v428
    %560 = vmatprep.subr.mxu0 0.0
    %561 = vmatpush1.msra.mxu0 %v429
    %562 = vmatprep.subr.mxu0 0.0
    %563 = vmatpush1.msra.mxu0 %v430
    %564 = vmatprep.subr.mxu0 0.0
    %565 = vmatpush1.msra.mxu0 %v431
    %566 = vmatprep.subr.mxu0 0.0
    %567 = vmatpush1.msra.mxu0 %v432
    %568 = vmatprep.subr.mxu0 0.0
    %569 = vmatpush1.msra.mxu0 %v433
    %570 = vmatprep.subr.mxu0 0.0
    %571 = vmatpush1.msra.mxu0 %v434
    %572 = vmatprep.subr.mxu0 0.0
    %573 = vmatpush1.msra.mxu0 %v435
    %574 = vmatprep.subr.mxu0 0.0
    %575 = vmatpush1.msra.mxu0 %v436
    %576 = vmatprep.subr.mxu0 0.0
    %577 = vmatpush1.msra.mxu0 %v437
    %578 = vmatprep.subr.mxu0 0.0
    %579 = vmatpush1.msra.mxu0 %v438
    %580 = vmatprep.subr.mxu0 0.0
    %581 = vmatpush1.msra.mxu0 %v439
    %582 = vmatprep.subr.mxu0 0.0
    %583 = vmatpush1.msra.mxu0 %v440
    %584 = vmatprep.subr.mxu0 0.0
    %585 = vmatpush1.msra.mxu0 0.0
    %586 = vmatprep.subr.mxu0 0.0
    %587 = vmatpush1.msra.mxu0 0.0
    %588 = vmatprep.subr.mxu0 0.0
    %589 = vmatpush1.msra.mxu0 0.0
    %590 = vmatprep.subr.mxu0 0.0
    %591 = vmatpush1.msra.mxu0 0.0
    %592 = vmatprep.subr.mxu0 0.0
    %593 = vmatpush1.msra.mxu0 0.0
    %594 = vmatprep.subr.mxu0 0.0
    %595 = vmatpush1.msra.mxu0 0.0
    %596 = vmatprep.subr.mxu0 0.0
    %597 = vmatpush1.msra.mxu0 0.0
    %598 = vmatprep.subr.mxu0 0.0
    %599 = vmatpush1.msra.mxu0 0.0
    %600 = vmatprep.subr.mxu0 0.0
    %601 = vmatpush1.msra.mxu0 0.0
    %602 = vmatprep.subr.mxu0 0.0
    %603 = vmatpush1.msra.mxu0 0.0
    %604 = vmatprep.subr.mxu0 0.0
    %605 = vmatpush1.msra.mxu0 0.0
    %606 = vmatprep.subr.mxu0 0.0
    %607 = vmatpush1.msra.mxu0 0.0
    %608 = vmatprep.subr.mxu0 0.0
    %609 = vmatpush1.msra.mxu0 0.0
    %610 = vmatprep.subr.mxu0 0.0
    %611 = vmatpush1.msra.mxu0 0.0
    %612 = vmatprep.subr.mxu0 0.0
    %613 = vmatpush1.msra.mxu0 0.0
    %614 = vmatprep.subr.mxu0 0.0
    %615 = vmatpush1.msra.mxu0 0.0
    %616 = vmatprep.mubr.f32.mxu0 0.0
    %617 = vmatmul.mubr.f32.gmra.mrb[0].mxu0 %v420
    %v618 = vpop.f32.mrb[0].mxu0
    %v619 = vadd.f32 %v530, %v618
    %v620 = vpop.f32.mrb[0].mxu0
    %621 = vmatprep.mubr.f32.mxu0 0.0
    %622 = vmatmul.mubr.f32.gmra.mrb[0].mxu0 %v421
    %v623 = vpop.f32.mrb[0].mxu0
    %v624 = vadd.f32 %v535, %v623
    %v625 = vpop.f32.mrb[0].mxu0
    %626 = vmatprep.mubr.f32.mxu0 0.0
    %627 = vmatmul.mubr.f32.gmra.mrb[0].mxu0 %v422
    %v628 = vpop.f32.mrb[0].mxu0
    %v629 = vpop.f32.mrb[0].mxu0
    %630 = vmatprep.mubr.f32.mxu0 0.0
    %631 = vmatmul.mubr.f32.gmra.mrb[0].mxu0 %v423
    %v632 = vpop.f32.mrb[0].mxu0
    %v633 = vadd.f32 %v544, %v632
    %v634 = vpop.f32.mrb[0].mxu0
    %635 = vmatprep.mubr.f32.mxu0 0.0
    %636 = vmatmul.mubr.f32.gmra.mrb[0].mxu0 %v424
    %v637 = vpop.f32.mrb[0].mxu0
    %v638 = vadd.f32 %v549, %v637
    %v639 = vpop.f32.mrb[0].mxu0
    %640 = vdwg.mxu0
    %v641 = vld [vmem:[#allocation3 + $0x2] sm:$0xff]
    %v642 = vld [vmem:[#allocation3 + $0xa] sm:$0xff]
    %v643 = vld [vmem:[#allocation3 + $0x12] sm:$0xff]
    %v644 = vld [vmem:[#allocation3 + $0x1a] sm:$0xff]
    %v645 = vld [vmem:[#allocation3 + $0x22] sm:$0xff]
    %s646 = scalar_lea.vmem %s3, 256
    %v647 = vld [vmem:[%s646] sm:$0xff]
    %v648 = vld [vmem:[%s646 + $0x8] sm:$0xff]
    %v649 = vld [vmem:[%s646 + $0x10] sm:$0xff]
    %v650 = vld [vmem:[%s646 + $0x18] sm:$0xff]
    %v651 = vld [vmem:[%s646 + $0x20] sm:$0xff]
    %v652 = vld [vmem:[%s646 + $0x28] sm:$0xff]
    %v653 = vld [vmem:[%s646 + $0x30] sm:$0xff]
    %v654 = vld [vmem:[%s646 + $0x38] sm:$0xff]
    %v655 = vld [vmem:[%s646 + $0x40] sm:$0xff]
    %v656 = vld [vmem:[%s646 + $0x48] sm:$0xff]
    %v657 = vld [vmem:[%s646 + $0x50] sm:$0xff]
    %v658 = vld [vmem:[%s646 + $0x58] sm:$0xff]
    %v659 = vld [vmem:[%s646 + $0x60] sm:$0xff]
    %v660 = vld [vmem:[%s646 + $0x68] sm:$0xff]
    %v661 = vld [vmem:[%s646 + $0x70] sm:$0xff]
    %v662 = vld [vmem:[%s646 + $0x78] sm:$0xff]
    %663 = vmatprep.subr.mxu0 0.0
    %664 = vmatpush1.msra.mxu0 %v647
    %665 = vmatprep.subr.mxu0 0.0
    %666 = vmatpush1.msra.mxu0 %v648
    %667 = vmatprep.subr.mxu0 0.0
    %668 = vmatpush1.msra.mxu0 %v649
    %669 = vmatprep.subr.mxu0 0.0
    %670 = vmatpush1.msra.mxu0 %v650
    %671 = vmatprep.subr.mxu0 0.0
    %672 = vmatpush1.msra.mxu0 %v651
    %673 = vmatprep.subr.mxu0 0.0
    %674 = vmatpush1.msra.mxu0 %v652
    %675 = vmatprep.subr.mxu0 0.0
    %676 = vmatpush1.msra.mxu0 %v653
    %677 = vmatprep.subr.mxu0 0.0
    %678 = vmatpush1.msra.mxu0 %v654
    %679 = vmatprep.subr.mxu0 0.0
    %680 = vmatpush1.msra.mxu0 %v655
    %681 = vmatprep.subr.mxu0 0.0
    %682 = vmatpush1.msra.mxu0 %v656
    %683 = vmatprep.subr.mxu0 0.0
    %684 = vmatpush1.msra.mxu0 %v657
    %685 = vmatprep.subr.mxu0 0.0
    %686 = vmatpush1.msra.mxu0 %v658
    %687 = vmatprep.subr.mxu0 0.0
    %688 = vmatpush1.msra.mxu0 %v659
    %689 = vmatprep.subr.mxu0 0.0
    %690 = vmatpush1.msra.mxu0 %v660
    %691 = vmatprep.subr.mxu0 0.0
    %692 = vmatpush1.msra.mxu0 %v661
    %693 = vmatprep.subr.mxu0 0.0
    %694 = vmatpush1.msra.mxu0 %v662
    %695 = vmatprep.subr.mxu0 0.0
    %696 = vmatpush1.msra.mxu0 0.0
    %697 = vmatprep.subr.mxu0 0.0
    %698 = vmatpush1.msra.mxu0 0.0
    %699 = vmatprep.subr.mxu0 0.0
    %700 = vmatpush1.msra.mxu0 0.0
    %701 = vmatprep.subr.mxu0 0.0
    %702 = vmatpush1.msra.mxu0 0.0
    %703 = vmatprep.subr.mxu0 0.0
    %704 = vmatpush1.msra.mxu0 0.0
    %705 = vmatprep.subr.mxu0 0.0
    %706 = vmatpush1.msra.mxu0 0.0
    %707 = vmatprep.subr.mxu0 0.0
    %708 = vmatpush1.msra.mxu0 0.0
    %709 = vmatprep.subr.mxu0 0.0
    %710 = vmatpush1.msra.mxu0 0.0
    %711 = vmatprep.subr.mxu0 0.0
    %712 = vmatpush1.msra.mxu0 0.0
    %713 = vmatprep.subr.mxu0 0.0
    %714 = vmatpush1.msra.mxu0 0.0
    %715 = vmatprep.subr.mxu0 0.0
    %716 = vmatpush1.msra.mxu0 0.0
    %717 = vmatprep.subr.mxu0 0.0
    %718 = vmatpush1.msra.mxu0 0.0
    %719 = vmatprep.subr.mxu0 0.0
    %720 = vmatpush1.msra.mxu0 0.0
    %721 = vmatprep.subr.mxu0 0.0
    %722 = vmatpush1.msra.mxu0 0.0
    %723 = vmatprep.subr.mxu0 0.0
    %724 = vmatpush1.msra.mxu0 0.0
    %725 = vmatprep.subr.mxu0 0.0
    %726 = vmatpush1.msra.mxu0 0.0
    %727 = vmatprep.mubr.f32.mxu0 0.0
    %728 = vmatmul.mubr.f32.gmra.mrb[0].mxu0 %v641
    %v729 = vpop.f32.mrb[0].mxu0
    %v730 = vadd.f32 0.0, %v729
    %v731 = vpop.f32.mrb[0].mxu0
    %732 = vmatprep.mubr.f32.mxu0 0.0
    %733 = vmatmul.mubr.f32.gmra.mrb[0].mxu0 %v642
    %v734 = vpop.f32.mrb[0].mxu0
    %v735 = vadd.f32 0.0, %v734
    %v736 = vpop.f32.mrb[0].mxu0
    %737 = vmatprep.mubr.f32.mxu0 0.0
    %738 = vmatmul.mubr.f32.gmra.mrb[0].mxu0 %v643
    %v739 = vpop.f32.mrb[0].mxu0
    %v740 = vpop.f32.mrb[0].mxu0
    %741 = vmatprep.mubr.f32.mxu0 0.0
    %742 = vmatmul.mubr.f32.gmra.mrb[0].mxu0 %v644
    %v743 = vpop.f32.mrb[0].mxu0
    %v744 = vadd.f32 0.0, %v743
    %v745 = vpop.f32.mrb[0].mxu0
    %746 = vmatprep.mubr.f32.mxu0 0.0
    %747 = vmatmul.mubr.f32.gmra.mrb[0].mxu0 %v645
    %v748 = vpop.f32.mrb[0].mxu0
    %v749 = vadd.f32 0.0, %v748
    %v750 = vpop.f32.mrb[0].mxu0
    %751 = vdwg.mxu0
    %v752 = vadd.f32 %v619, %v730
    %v753 = vadd.f32 %v624, %v735
    %v754 = vadd.f32 %v633, %v744
    %v755 = vadd.f32 %v638, %v749
    %v756 = vld [vmem:[%s4] sm:$0x1]
    %v758 = vlaneseq
    %v759 = vshrl.u32 %v758, 7
    %v760 = vsub.s32 0, %v759
    %v761 = vrot.slane %v756, %v760
    %v763 = vadd.f32 %v752, %v761
    %v764 = vadd.f32 %v753, %v761
    %v765 = vadd.f32 %v754, %v761
    %v766 = vadd.f32 %v755, %v761
    %v767 = vmul.f32 %v763, 0.2
    %v768 = vmul.f32 %v764, 0.2
    %v769 = vmul.f32 %v765, 0.2
    %v770 = vmul.f32 %v766, 0.2
    %v771 = vmax.f32 %v763, %v767
    %v772 = vmax.f32 %v764, %v768
    %v773 = vmax.f32 %v765, %v769
    %v774 = vmax.f32 %v766, %v770
    %775 = vst.msk [vmem:[#allocation4] sm:$0xff] %vm26, %v771
    %776 = vst.msk [vmem:[#allocation4 + $0x8] sm:$0xff] %vm26, %v772
    %s777 = scalar_lea.vmem [#allocation4], 16
    %778 = vst.msk [vmem:[%s777] sm:$0xff] %vm26, %v773
    %779 = vst.msk [vmem:[%s777 + $0x8] sm:$0xff] %vm26, %v774
    // Predicated region
    $region22: #{tpu_custom_call.1} parent=1 // pred_check
      _
    $region23: #{tpu_custom_call.1} parent=1 // pred_check_branch
      %781 = sbr.rel (0) target = $region25
    $region24: #{tpu_custom_call.1} parent=1 // pred_region
      %s783 = ssub.s32 512, 512
      %784 = vsyncadd [#allocation5], %s783
      %s785 = sshll.u32 [#allocation4], 4
      %s786 = int_to_ptr.vmem [resolvable:$true] %s785
      %791 = dma.vmem_to_hbm [thread:$0]  %s786, 512, %s5, [#allocation5], 128, 128, 8
    $region25: #{tpu_custom_call.1} parent=1 // pred_fallthru
      _
    // Predicated region
    $region26: #{tpu_custom_call.1} parent=1 // pred_check
      _
    $region27: #{tpu_custom_call.1} parent=1 // pred_check_branch
      %793 = sbr.rel (0) target = $region29
    $region28: #{tpu_custom_call.1} parent=1 // pred_region
      %794 = dma.done [#allocation5], 512
    $region29: #{tpu_custom_call.1} parent=1 // pred_fallthru
      _
    %795 = vsyncpa [#allocation5], 1

</llo_original>
